<compile_context>
chip_gen: v5e
topology: v5e:2x2
jax: 0.10.0
libtpu: 0.0.40
codegen_flags: <defaults>
</compile_context>

<pallas_src>
import jax
import jax.numpy as jnp
from jax.experimental import pallas as pl
from jax.experimental.pallas import tpu as pltpu

LN_EPS = 1e-5  # nn.LayerNorm default


def _patch_embed_kernel(x_ref, w_ref, sb_ref, posb_ref, o_ref):
    # x_ref:    (TILE_N, K_pad) bf16 patches for one (N-tile, batch) grid step
    # w_ref:    (K_pad, D)      bf16 projection weight (conv weight reshaped, K zero-padded)
    # sb_ref:   (2, D)          f32  row 0: conv bias, row 1: LN gamma
    # posb_ref: (TILE_N, D)     bf16 2D positional embedding with LN beta folded in
    # o_ref:    (TILE_N, D)     f32 (or bf16 if out_dtype=bf16)
    y = jnp.dot(x_ref[...], w_ref[...], preferred_element_type=jnp.float32)
    y = y + sb_ref[0:1, :]                                     # conv bias

    # LayerNorm over embed_dim (biased variance, like torch.nn.LayerNorm), f32.
    # Two-pass variance kept for stability; E[y^2]-mean^2 only if VALU-bound.
    mean = jnp.mean(y, axis=-1, keepdims=True)
    var = jnp.mean((y - mean) ** 2, axis=-1, keepdims=True)
    yn = (y - mean) * jax.lax.rsqrt(var + LN_EPS)

    # gamma scale, then (pos_embed + beta) add; beta was folded into posb.
    o_ref[...] = (yn * sb_ref[1:2, :]
                  + posb_ref[...].astype(jnp.float32)).astype(o_ref.dtype)


def _round_up(v, m):
    return ((v + m - 1) // m) * m


def _cdiv(a, b):
    return (a + b - 1) // b


def _vmem_limit_bytes():
    """Generation-aware Mosaic scoped-VMEM cap."""
    try:
        kind = jax.devices()[0].device_kind.lower()
    except Exception:
        kind = ""
    if "v5" in kind or "v6" in kind:
        # v5e / v6e have 128 MiB physical VMEM: allow TILE_N >= 1024 tiles.
        return 96 * 1024 * 1024
    # v7x (64 MiB physical) and unknown chips: leave headroom for compiler scratch.
    return 48 * 1024 * 1024


def _choose_tile(N, B, tile_n):
    """Pick (eff_tile_n, N_pad): large 16-aligned tiles with minimal padding and
    >= 2 steps on the parallel N axis when B == 1 (so both v7x TCs get work)."""
    if N >= tile_n:
        steps = _cdiv(N, tile_n)
        eff = _round_up(_cdiv(N, steps), 16)   # balanced tile: minimal pad rows
        return eff, eff * steps
    if B == 1 and N > 16:
        eff = _round_up(_cdiv(N, 2), 16)       # force 2 steps for v7x TC sharding
        return eff, 2 * eff
    eff = _round_up(N, 16)                     # bf16 packs 16 rows per vreg
    return eff, eff


def _const_spec(block_shape, index_map, single_buffer):
    if single_buffer:
        # Constant block index -> single-buffer to save VMEM (esp. v7x, 64 MiB).
        return pl.BlockSpec(block_shape, index_map, pipeline_mode=pl.Buffered(1))
    return pl.BlockSpec(block_shape, index_map)


def _patch_call(patches, w_mat, scale_bias, posb, tile_n, out_dtype, single_buffer):
    B, N_pad, K_pad = patches.shape
    D = w_mat.shape[1]
    return pl.pallas_call(
        _patch_embed_kernel,
        out_shape=jax.ShapeDtypeStruct((B, N_pad, D), out_dtype),
        grid_spec=pltpu.PrefetchScalarGridSpec(
            num_scalar_prefetch=0,
            # Batch innermost: consecutive steps reuse the same posb block, so
            # its DMA is skipped (saves (B-1)*N*D bytes of pos-embed traffic).
            grid=(N_pad // tile_n, B),
            in_specs=[
                pl.BlockSpec((pl.Squeezed(), tile_n, K_pad), lambda n, b: (b, n, 0)),
                _const_spec((K_pad, D), lambda n, b: (0, 0), single_buffer),
                _const_spec((2, D), lambda n, b: (0, 0), single_buffer),
                pl.BlockSpec((tile_n, D), lambda n, b: (n, 0)),
            ],
            out_specs=pl.BlockSpec((pl.Squeezed(), tile_n, D), lambda n, b: (b, n, 0)),
        ),
        compiler_params=pltpu.CompilerParams(
            # Both axes independent (no reduction) -> shard across TCs on v7x.
            dimension_semantics=("parallel", "parallel"),
            vmem_limit_bytes=_vmem_limit_bytes(),
        ),
    )(patches, w_mat, scale_bias, posb)


def patch_embed_forward(x, params, patch_size, nx, ny, nglo, tile_n=512,
                        out_dtype=jnp.float32):
    """x: (B, C, H, W) float32. Returns (out, nx, ny) with out: (B, nglo+N, D).

    tile_n: patch rows per grid step; 512 default (~85% of HBM roofline for a
    streamed tile), sweep 1024 on v5e/v6e (128 MiB VMEM).
    out_dtype: pass jnp.bfloat16 if the downstream stack consumes bf16 (halves
    the output write); f32 here so the tolerance check stays tight.
    """
    B, C, H, W = x.shape
    p = patch_size
    assert H == nx * p and W == ny * p, "Fix input size!"
    D = params["proj_w"].shape[0]
    N = nx * ny
    K = C * p * p
    K_pad = _round_up(K, 128)   # lane-dense loads + full MXU contraction depth

    eff_tile_n, N_pad = _choose_tile(N, B, tile_n)

    # --- glue: extract non-overlapping patches, (c,u,v)-ordered, row-major (i,j).
    # bf16 halves the HBM round trip of the materialized patch tensor.
    # TODO(synk): fuse patch extraction into the kernel (x with memory_space=
    # pl.ANY, DMA (C, r*p, W) row-slabs per tile and reorder to (TILE_N, K) in
    # VMEM) to remove this round trip entirely; skipped because the in-kernel
    # 5-D transpose is a lowering risk without hardware to verify against.
    x_bf = x.astype(jnp.bfloat16)
    patches = x_bf.reshape(B, C, nx, p, ny, p)
    patches = jnp.transpose(patches, (0, 2, 4, 1, 3, 5)).reshape(B, N, K)
    patches = jnp.pad(patches, ((0, 0), (0, N_pad - N), (0, K_pad - K)))

    # Projection weight (D, C, p, p) -> (K_pad, D), bf16 for the MXU.
    w_mat = params["proj_w"].reshape(D, K).T.astype(jnp.bfloat16)
    w_mat = jnp.pad(w_mat, ((0, K_pad - K), (0, 0)))

    # Conv bias + LN gamma stacked into one small f32 operand.
    scale_bias = jnp.stack(
        [params["proj_b"].astype(jnp.float32), params["ln_gamma"].astype(jnp.float32)],
        axis=0,
    )  # (2, D)

    # --- glue: 2D positional embedding (nx, ny, D) -> (N, D), LN beta folded in.
    # Stored bf16 (upcast in-kernel): halves what used to be the largest f32 stream.
    # TODO(synk): rebuild the pos tile in-kernel from xpe/ype broadcasts (needs
    # TILE_N to be a multiple of ny) to drop this (N, D) stream entirely.
    dh = D // 2
    xpe = params["x_pos_embed"].reshape(nx, dh)
    ype = params["y_pos_embed"].reshape(ny, dh)
    pos2d = jnp.concatenate(
        [jnp.broadcast_to(xpe[:, None, :], (nx, ny, dh)),
         jnp.broadcast_to(ype[None, :, :], (nx, ny, dh))],
        axis=-1,
    ).reshape(N, D)
    posb = (pos2d + params["ln_beta"][None, :]).astype(jnp.bfloat16)
    if N_pad != N:
        posb = jnp.pad(posb, ((0, N_pad - N), (0, 0)))

    # --- Pallas kernel: proj matmul + layernorm + pos add, tiled over (N, B) ---
    if hasattr(pl, "Buffered"):
        try:
            patch_out = _patch_call(patches, w_mat, scale_bias, posb, eff_tile_n,
                                    out_dtype, single_buffer=True)
        except Exception:
            # Only meant for a Mosaic build that rejects pipeline_mode=
            # pl.Buffered(1).  Any genuine kernel bug reproduces -- and raises
            # -- in the fallback call below, so nothing is silently swallowed.
            patch_out = _patch_call(patches, w_mat, scale_bias, posb, eff_tile_n,
                                    out_dtype, single_buffer=False)
    else:
        patch_out = _patch_call(patches, w_mat, scale_bias, posb, eff_tile_n,
                                out_dtype, single_buffer=False)
    patch_out = patch_out[:, :N, :]

    # --- glue: cls tokens (not layer-normed) + cls positional embedding, prepend.
    # TODO(synk): avoid this full-tensor concat copy (return cls separately, or
    # dynamic_update_slice into a donated (B, nglo+N, D) buffer).
    if nglo >= 1:
        cls = params["cls_token"] + params["cls_pos_embed"]      # (1, nglo, D)
        cls = jnp.broadcast_to(cls, (B, nglo, D)).astype(out_dtype)
        out = jnp.concatenate([cls, patch_out], axis=1)
    else:
        out = patch_out

    # pos_drop with drop_rate=0.0 is identity.
    return out, nx, ny


def init_params(key, patch_size, nx, ny, in_chans, embed_dim, nglo):
    p = patch_size
    D = embed_dim
    K = in_chans * p * p
    ks = jax.random.split(key, 6)
    # TODO(synk): trunc_normal_ replaced with plain normal*0.02 (deterministic synthetic init).
    return {
        "proj_w": jax.random.normal(ks[0], (D, in_chans, p, p), jnp.float32)
                  * (1.0 / jnp.sqrt(K)),
        "proj_b": jax.random.normal(ks[1], (D,), jnp.float32) * 0.02,
        "ln_gamma": jnp.ones((D,), jnp.float32),
        "ln_beta": jnp.zeros((D,), jnp.float32),
        "cls_token": jax.random.normal(ks[2], (1, nglo, D), jnp.float32) * 0.02,
        "cls_pos_embed": jax.random.normal(ks[3], (1, nglo, D), jnp.float32) * 0.02,
        "x_pos_embed": jax.random.normal(ks[4], (1, nx, D // 2), jnp.float32) * 0.02,
        "y_pos_embed": jax.random.normal(ks[5], (1, ny, D // 2), jnp.float32) * 0.02,
    }


def _reference_forward(x, params, patch_size, nx, ny, nglo):
    """Pure-JAX f32 reference of the PyTorch module (for a tolerance check)."""
    B, C, H, W = x.shape
    p = patch_size
    D = params["proj_w"].shape[0]
    N = nx * ny
    K = C * p * p
    patches = x.reshape(B, C, nx, p, ny, p)
    patches = jnp.transpose(patches, (0, 2, 4, 1, 3, 5)).reshape(B, N, K)
    y = patches @ params["proj_w"].reshape(D, K).T + params["proj_b"]
    mean = jnp.mean(y, axis=-1, keepdims=True)
    var = jnp.mean((y - mean) ** 2, axis=-1, keepdims=True)
    yn = (y - mean) * jax.lax.rsqrt(var + LN_EPS)
    yn = yn * params["ln_gamma"] + params["ln_beta"]
    dh = D // 2
    xpe = params["x_pos_embed"].reshape(nx, dh)
    ype = params["y_pos_embed"].reshape(ny, dh)
    pos2d = jnp.concatenate(
        [jnp.broadcast_to(xpe[:, None, :], (nx, ny, dh)),
         jnp.broadcast_to(ype[None, :, :], (nx, ny, dh))],
        axis=-1,
    ).reshape(N, D)
    out = yn + pos2d[None]
    if nglo >= 1:
        cls = params["cls_token"] + params["cls_pos_embed"]
        cls = jnp.broadcast_to(cls, (B, nglo, D))
        out = jnp.concatenate([cls, out], axis=1)
    return out


if __name__ == "__main__":
    # Small shapes consistent with the module.  (Real msvit uses D that is a
    # multiple of 128, which keeps the output lane-dense; D=32 here is demo-only.)
    B, C = 2, 4
    patch_size = 4
    nx, ny = 4, 4
    H, W = nx * patch_size, ny * patch_size          # 16 x 16
    embed_dim = 32
    nglo = 1

    key = jax.random.PRNGKey(0)
    kx, kp = jax.random.split(key)
    x = jax.random.normal(kx, (B, C, H, W), jnp.float32)
    params = init_params(kp, patch_size, nx, ny, C, embed_dim, nglo)

    out, onx, ony = patch_embed_forward(x, params, patch_size, nx, ny, nglo)
    out = jax.block_until_ready(out)
    assert out.shape == (B, nglo + nx * ny, embed_dim), out.shape

    ref = _reference_forward(x, params, patch_size, nx, ny, nglo)
    err = float(jnp.max(jnp.abs(out - ref)))
    assert err < 5e-2, f"max abs err {err}"  # bf16 matmul / pos inputs, f32 accumulate
    print("KERNEL_OK")
</pallas_src>

<mosaic_0001>
module attributes {stable_mosaic.version = 11 : i64} {
  func.func @_patch_embed_kernel(%arg0: i32, %arg1: i32, %arg2: memref<1x16x128xbf16, #tpu.memory_space<vmem>>, %arg3: memref<128x32xbf16, #tpu.memory_space<vmem>>, %arg4: memref<2x32xf32, #tpu.memory_space<vmem>>, %arg5: memref<16x32xbf16, #tpu.memory_space<vmem>>, %arg6: memref<1x16x32xf32, #tpu.memory_space<vmem>>) attributes {dimension_semantics = [#tpu.dimension_semantics<parallel>, #tpu.dimension_semantics<parallel>], iteration_bounds = array<i64: 1, 2>, scalar_prefetch = 0 : i64, scratch_operands = 0 : i64, tpu.core_type = #tpu.core_type<tc>, window_params = [{transform_indices = @transform_0, window_bounds = array<i64: 1, 16, 128>}, {pipeline_mode = #tpu.pipeline_mode<synchronous>, transform_indices = @transform_1, window_bounds = array<i64: 128, 32>}, {pipeline_mode = #tpu.pipeline_mode<synchronous>, transform_indices = @transform_2, window_bounds = array<i64: 2, 32>}, {transform_indices = @transform_3, window_bounds = array<i64: 16, 32>}, {transform_indices = @transform_4, window_bounds = array<i64: 1, 16, 32>}]} {
    %c0 = arith.constant 0 : index
    %c0_0 = arith.constant 0 : index
    %c0_1 = arith.constant 0 : index
    %0 = vector.load %arg2[%c0, %c0_0, %c0_1] : memref<1x16x128xbf16, #tpu.memory_space<vmem>>, vector<1x16x128xbf16>
    %1 = vector.shape_cast %0 : vector<1x16x128xbf16> to vector<16x128xbf16>
    %c0_2 = arith.constant 0 : index
    %c0_3 = arith.constant 0 : index
    %2 = vector.load %arg3[%c0_2, %c0_3] : memref<128x32xbf16, #tpu.memory_space<vmem>>, vector<128x32xbf16>
    %cst = arith.constant dense<0.000000e+00> : vector<16x32xf32>
    %3 = tpu.matmul %1, %2, %cst {dimension_numbers = #tpu.dot_dimension_numbers<[1], [0], [0], [1], [0, 0, 1, 1], [], []>} : vector<16x128xbf16>, vector<128x32xbf16>, vector<16x32xf32> -> vector<16x32xf32>
    %c0_4 = arith.constant 0 : index
    %c0_5 = arith.constant 0 : index
    %4 = vector.load %arg4[%c0_4, %c0_5] : memref<2x32xf32, #tpu.memory_space<vmem>>, vector<1x32xf32>
    %5 = vector.broadcast %4 : vector<1x32xf32> to vector<16x32xf32>
    %6 = arith.addf %3, %5 : vector<16x32xf32>
    %cst_6 = arith.constant dense<0.000000e+00> : vector<16xf32>
    %7 = vector.multi_reduction <add>, %6, %cst_6 [1] : vector<16x32xf32> to vector<16xf32>
    %8 = vector.shape_cast %7 : vector<16xf32> to vector<16x1xf32>
    %cst_7 = arith.constant 3.200000e+01 : f32
    %9 = vector.broadcast %cst_7 : f32 to vector<16x1xf32>
    %10 = arith.divf %8, %9 : vector<16x1xf32>
    %11 = vector.broadcast %10 : vector<16x1xf32> to vector<16x32xf32>
    %12 = arith.subf %6, %11 : vector<16x32xf32>
    %13 = arith.mulf %12, %12 : vector<16x32xf32>
    %cst_8 = arith.constant dense<0.000000e+00> : vector<16xf32>
    %14 = vector.multi_reduction <add>, %13, %cst_8 [1] : vector<16x32xf32> to vector<16xf32>
    %15 = vector.shape_cast %14 : vector<16xf32> to vector<16x1xf32>
    %cst_9 = arith.constant 3.200000e+01 : f32
    %16 = vector.broadcast %cst_9 : f32 to vector<16x1xf32>
    %17 = arith.divf %15, %16 : vector<16x1xf32>
    %18 = vector.broadcast %10 : vector<16x1xf32> to vector<16x32xf32>
    %19 = arith.subf %6, %18 : vector<16x32xf32>
    %cst_10 = arith.constant 9.99999974E-6 : f32
    %20 = vector.broadcast %cst_10 : f32 to vector<16x1xf32>
    %21 = arith.addf %17, %20 : vector<16x1xf32>
    %22 = math.rsqrt %21 : vector<16x1xf32>
    %23 = vector.broadcast %22 : vector<16x1xf32> to vector<16x32xf32>
    %24 = arith.mulf %19, %23 : vector<16x32xf32>
    %c1 = arith.constant 1 : index
    %c0_11 = arith.constant 0 : index
    %25 = vector.load %arg4[%c1, %c0_11] : memref<2x32xf32, #tpu.memory_space<vmem>>, vector<1x32xf32>
    %26 = vector.broadcast %25 : vector<1x32xf32> to vector<16x32xf32>
    %27 = arith.mulf %24, %26 : vector<16x32xf32>
    %c0_12 = arith.constant 0 : index
    %c0_13 = arith.constant 0 : index
    %28 = vector.load %arg5[%c0_12, %c0_13] : memref<16x32xbf16, #tpu.memory_space<vmem>>, vector<16x32xbf16>
    %29 = arith.extf %28 : vector<16x32xbf16> to vector<16x32xf32>
    %30 = arith.addf %27, %29 : vector<16x32xf32>
    %c0_14 = arith.constant 0 : index
    %c0_15 = arith.constant 0 : index
    %c0_16 = arith.constant 0 : index
    %31 = vector.load %arg6[%c0_14, %c0_15, %c0_16] : memref<1x16x32xf32, #tpu.memory_space<vmem>>, vector<1x16x32xf32>
    %32 = vector.shape_cast %31 : vector<1x16x32xf32> to vector<16x32xf32>
    %33 = vector.shape_cast %30 : vector<16x32xf32> to vector<1x16x32xf32>
    tpu.vector_store %arg6[%c0_14, %c0_15, %c0_16], %33 {strides = array<i32>} : memref<1x16x32xf32, #tpu.memory_space<vmem>>, vector<1x16x32xf32>,
    return
  }
  func.func @transform_0(%arg0: i32, %arg1: i32) -> (i32, i32, i32) {
    %c0_i32 = arith.constant 0 : i32
    %c0_i32_0 = arith.constant 0 : i32
    return %arg1, %arg0, %c0_i32 : i32, i32, i32
  }
  func.func @transform_1(%arg0: i32, %arg1: i32) -> (i32, i32) {
    %c0_i32 = arith.constant 0 : i32
    %c0_i32_0 = arith.constant 0 : i32
    %c0_i32_1 = arith.constant 0 : i32
    return %c0_i32, %c0_i32_0 : i32, i32
  }
  func.func @transform_2(%arg0: i32, %arg1: i32) -> (i32, i32) {
    %c0_i32 = arith.constant 0 : i32
    %c0_i32_0 = arith.constant 0 : i32
    %c0_i32_1 = arith.constant 0 : i32
    return %c0_i32, %c0_i32_0 : i32, i32
  }
  func.func @transform_3(%arg0: i32, %arg1: i32) -> (i32, i32) {
    %c0_i32 = arith.constant 0 : i32
    %c0_i32_0 = arith.constant 0 : i32
    return %arg0, %c0_i32 : i32, i32
  }
  func.func @transform_4(%arg0: i32, %arg1: i32) -> (i32, i32, i32) {
    %c0_i32 = arith.constant 0 : i32
    %c0_i32_0 = arith.constant 0 : i32
    return %arg1, %arg0, %c0_i32 : i32, i32, i32
  }
}

module attributes {stable_mosaic.version = 11 : i64} {
  func.func @_patch_embed_kernel(%arg0: i32, %arg1: i32, %arg2: memref<1x16x128xbf16, #tpu.memory_space<vmem>>, %arg3: memref<128x32xbf16, #tpu.memory_space<vmem>>, %arg4: memref<2x32xf32, #tpu.memory_space<vmem>>, %arg5: memref<16x32xbf16, #tpu.memory_space<vmem>>, %arg6: memref<1x16x32xf32, #tpu.memory_space<vmem>>) attributes {dimension_semantics = [#tpu.dimension_semantics<parallel>, #tpu.dimension_semantics<parallel>], iteration_bounds = array<i64: 1, 2>, scalar_prefetch = 0 : i64, scratch_operands = 0 : i64, tpu.core_type = #tpu.core_type<tc>, window_params = [{transform_indices = @transform_0, window_bounds = array<i64: 1, 16, 128>}, {pipeline_mode = #tpu.pipeline_mode<synchronous>, transform_indices = @transform_1, window_bounds = array<i64: 128, 32>}, {pipeline_mode = #tpu.pipeline_mode<synchronous>, transform_indices = @transform_2, window_bounds = array<i64: 2, 32>}, {transform_indices = @transform_3, window_bounds = array<i64: 16, 32>}, {transform_indices = @transform_4, window_bounds = array<i64: 1, 16, 32>}]} {
    %c0 = arith.constant 0 : index
    %c0_0 = arith.constant 0 : index
    %c0_1 = arith.constant 0 : index
    %0 = vector.load %arg2[%c0, %c0_0, %c0_1] : memref<1x16x128xbf16, #tpu.memory_space<vmem>>, vector<1x16x128xbf16>
    %1 = vector.shape_cast %0 : vector<1x16x128xbf16> to vector<16x128xbf16>
    %c0_2 = arith.constant 0 : index
    %c0_3 = arith.constant 0 : index
    %2 = vector.load %arg3[%c0_2, %c0_3] : memref<128x32xbf16, #tpu.memory_space<vmem>>, vector<128x32xbf16>
    %cst = arith.constant dense<0.000000e+00> : vector<16x32xf32>
    %3 = tpu.matmul %1, %2, %cst {dimension_numbers = #tpu.dot_dimension_numbers<[1], [0], [0], [1], [0, 0, 1, 1], [], []>} : vector<16x128xbf16>, vector<128x32xbf16>, vector<16x32xf32> -> vector<16x32xf32>
    %c0_4 = arith.constant 0 : index
    %c0_5 = arith.constant 0 : index
    %4 = vector.load %arg4[%c0_4, %c0_5] : memref<2x32xf32, #tpu.memory_space<vmem>>, vector<1x32xf32>
    %5 = vector.broadcast %4 : vector<1x32xf32> to vector<16x32xf32>
    %6 = arith.addf %3, %5 : vector<16x32xf32>
    %cst_6 = arith.constant dense<0.000000e+00> : vector<16xf32>
    %7 = vector.multi_reduction <add>, %6, %cst_6 [1] : vector<16x32xf32> to vector<16xf32>
    %8 = vector.shape_cast %7 : vector<16xf32> to vector<16x1xf32>
    %cst_7 = arith.constant 3.200000e+01 : f32
    %9 = vector.broadcast %cst_7 : f32 to vector<16x1xf32>
    %10 = arith.divf %8, %9 : vector<16x1xf32>
    %11 = vector.broadcast %10 : vector<16x1xf32> to vector<16x32xf32>
    %12 = arith.subf %6, %11 : vector<16x32xf32>
    %13 = arith.mulf %12, %12 : vector<16x32xf32>
    %cst_8 = arith.constant dense<0.000000e+00> : vector<16xf32>
    %14 = vector.multi_reduction <add>, %13, %cst_8 [1] : vector<16x32xf32> to vector<16xf32>
    %15 = vector.shape_cast %14 : vector<16xf32> to vector<16x1xf32>
    %cst_9 = arith.constant 3.200000e+01 : f32
    %16 = vector.broadcast %cst_9 : f32 to vector<16x1xf32>
    %17 = arith.divf %15, %16 : vector<16x1xf32>
    %18 = vector.broadcast %10 : vector<16x1xf32> to vector<16x32xf32>
    %19 = arith.subf %6, %18 : vector<16x32xf32>
    %cst_10 = arith.constant 9.99999974E-6 : f32
    %20 = vector.broadcast %cst_10 : f32 to vector<16x1xf32>
    %21 = arith.addf %17, %20 : vector<16x1xf32>
    %22 = math.rsqrt %21 : vector<16x1xf32>
    %23 = vector.broadcast %22 : vector<16x1xf32> to vector<16x32xf32>
    %24 = arith.mulf %19, %23 : vector<16x32xf32>
    %c1 = arith.constant 1 : index
    %c0_11 = arith.constant 0 : index
    %25 = vector.load %arg4[%c1, %c0_11] : memref<2x32xf32, #tpu.memory_space<vmem>>, vector<1x32xf32>
    %26 = vector.broadcast %25 : vector<1x32xf32> to vector<16x32xf32>
    %27 = arith.mulf %24, %26 : vector<16x32xf32>
    %c0_12 = arith.constant 0 : index
    %c0_13 = arith.constant 0 : index
    %28 = vector.load %arg5[%c0_12, %c0_13] : memref<16x32xbf16, #tpu.memory_space<vmem>>, vector<16x32xbf16>
    %29 = arith.extf %28 : vector<16x32xbf16> to vector<16x32xf32>
    %30 = arith.addf %27, %29 : vector<16x32xf32>
    %c0_14 = arith.constant 0 : index
    %c0_15 = arith.constant 0 : index
    %c0_16 = arith.constant 0 : index
    %31 = vector.load %arg6[%c0_14, %c0_15, %c0_16] : memref<1x16x32xf32, #tpu.memory_space<vmem>>, vector<1x16x32xf32>
    %32 = vector.shape_cast %31 : vector<1x16x32xf32> to vector<16x32xf32>
    %33 = vector.shape_cast %30 : vector<16x32xf32> to vector<1x16x32xf32>
    tpu.vector_store %arg6[%c0_14, %c0_15, %c0_16], %33 {strides = array<i32>} : memref<1x16x32xf32, #tpu.memory_space<vmem>>, vector<1x16x32xf32>,
    return
  }
  func.func @transform_0(%arg0: i32, %arg1: i32) -> (i32, i32, i32) {
    %c0_i32 = arith.constant 0 : i32
    %c0_i32_0 = arith.constant 0 : i32
    return %arg1, %arg0, %c0_i32 : i32, i32, i32
  }
  func.func @transform_1(%arg0: i32, %arg1: i32) -> (i32, i32) {
    %c0_i32 = arith.constant 0 : i32
    %c0_i32_0 = arith.constant 0 : i32
    %c0_i32_1 = arith.constant 0 : i32
    return %c0_i32, %c0_i32_0 : i32, i32
  }
  func.func @transform_2(%arg0: i32, %arg1: i32) -> (i32, i32) {
    %c0_i32 = arith.constant 0 : i32
    %c0_i32_0 = arith.constant 0 : i32
    %c0_i32_1 = arith.constant 0 : i32
    return %c0_i32, %c0_i32_0 : i32, i32
  }
  func.func @transform_3(%arg0: i32, %arg1: i32) -> (i32, i32) {
    %c0_i32 = arith.constant 0 : i32
    %c0_i32_0 = arith.constant 0 : i32
    return %arg0, %c0_i32 : i32, i32
  }
  func.func @transform_4(%arg0: i32, %arg1: i32) -> (i32, i32, i32) {
    %c0_i32 = arith.constant 0 : i32
    %c0_i32_0 = arith.constant 0 : i32
    return %arg1, %arg0, %c0_i32 : i32, i32, i32
  }
}

</mosaic_0001>

<llo_original>
// kernel: tpu_custom_call.1
$region0: #{tpu_custom_call.1}
  #allocation0 [shape = 'u32[]', space=smem, size = 0x4, offset = 0x4, fixed_abs, tag = 'smem constant byte address 0x4 - core index']
  #allocation1 [shape = 'u32[72,128]{1,0:T(1,128)}', space=vmem, size = 0x9000, scoped, tag = 'internal scratch']
  %s0 = inlined_call_operand.vmem [shape: bf16[2,16,128], index: 0, kind: input, shape index: {}]
  %s1 = inlined_call_operand.vmem [shape: bf16[128,32], index: 1, kind: input, shape index: {}]
  %s2 = inlined_call_operand.vmem [shape: f32[2,32], index: 2, kind: input, shape index: {}]
  %s3 = inlined_call_operand.vmem [shape: bf16[16,32], index: 3, kind: input, shape index: {}]
  %s4 = inlined_call_operand.hbm [shape: f32[2,16,32], index: 4, kind: output, shape index: {}]
  %s5 = sld [smem:[#allocation0]]
  $region49: #{tpu_custom_call.1} parent=0
    _
  %s7 = ssub.s32 1, %s5
  %s8 = scalar_select 0, %s7, %s5
  $region1: #{tpu_custom_call.1} parent=0
    #allocation2 [shape = 'u8[16384]{0}', space=vmem, size = 0x4000, scoped, tag = 'output window, operand 0']
    #allocation3 [shape = 's32[2]{0}', space=sflag, size = 0x8, scoped, tag = 'scoped memory for tpu_custom_call.1']
    %9 = vsyncpa [#allocation3], 0
    %s10 = scalar_lea.sflag [#allocation3], 1
    %11 = vsyncpa %s10, 0
    loop: start=0, step=1, limit=4
    $region2: #{tpu_custom_call.1} parent=1 // loop_pre_header
      _
    $region3: #{tpu_custom_call.1} parent=1 // loop_header
      %s13 = sphi 0, %s17
      %p14 = scmp.ge.s32.totalorder %s13, 4
      %s20 = sphi 0, %s32
      %s21 = sphi 0, %s28
      %s22 = sphi 0, %s20
      %s23 = sphi 0, %s21
      %s24 = sphi 0, %s22
      %s25 = sphi 0, %s23
      %s37 = sphi 0, %s39
      %s40 = sphi 0, %s37
      %s41 = sphi 0, %s40
      %s57 = sphi 0, %s41
      %s61 = sphi 0, %s61
      %s63 = sphi 0, %s61
      %s64 = sphi 0, %s63
      %s78 = sphi 0, %s64
      %s82 = sphi 0, %s82
      %s84 = sphi 0, %s82
      %s85 = sphi 0, %s84
      %s99 = sphi 0, %s85
      %s105 = sphi 0, %s107
      %s108 = sphi 0, %s105
      %s109 = sphi 0, %s108
      %s125 = sphi 0, %s109
      %s133 = sphi 0, %s135
      %s136 = sphi 0, %s133
      %s137 = sphi 0, %s136
      %s153 = sphi 0, %s137
    $region4: #{tpu_custom_call.1} parent=1 // loop_header_branch
      %16 = sbr.rel (%p14) target = $region8
    $region5: #{tpu_custom_call.1} parent=1 // loop_body
      %s18 = ssub.s32 %s13, 1
      %s19 = ssub.s32 %s13, 2
      %s26 = sadd.s32 1, %s21
      %p27 = scmp.ge.s32.totalorder %s26, 2
      %s28 = scalar_select %p27, 0, %s26
      %s29 = sadd.s32 1, %s20
      %s30 = scalar_select %p27, %s29, %s20
      %p31 = scmp.ge.s32.totalorder %s30, 1
      %s32 = scalar_select %p31, 0, %s30
      %s33 = ssub.s32 %s21, %s28
      %s34 = ssub.s32 %s20, %s32
      %s35 = sor.u32 %s33, %s34
      %p36 = scmp.eq.s32.totalorder %s35, 0
      %s38 = sadd.s32 %s37, 1
      %s39 = scalar_select %p36, %s37, %s38
      %p42 = pneg %p36
      %p43 = scmp.eq.s32.totalorder %s13, 1
      %p44 = por %p42, %p43
      %p45 = scmp.ne.s32.totalorder %s37, %s40
      %p46 = scmp.eq.s32.totalorder %s13, 0
      %p47 = por %p45, %p46
      %p48 = scmp.ne.s32.totalorder %s37, %s40
      %p49 = scmp.eq.s32.totalorder %s18, 1
      %p50 = por %p48, %p49
      %p51 = scmp.ne.s32.totalorder %s40, %s41
      %p52 = scmp.eq.s32.totalorder %s18, 0
      %p53 = por %p51, %p52
      %p54 = scmp.ne.s32.totalorder %s40, %s41
      %p55 = scmp.eq.s32.totalorder %s19, 1
      %p56 = por %p54, %p55
      %p58 = scmp.ne.s32.totalorder %s41, %s57
      %p59 = scmp.eq.s32.totalorder %s19, 0
      %p60 = por %p58, %p59
      %s62 = sadd.s32 %s61, 1
      %p65 = scmp.eq.s32.totalorder %s13, 1
      %p66 = scmp.ne.s32.totalorder %s61, %s63
      %p67 = scmp.eq.s32.totalorder %s13, 0
      %p68 = por %p66, %p67
      %p69 = scmp.ne.s32.totalorder %s61, %s63
      %p70 = scmp.eq.s32.totalorder %s18, 1
      %p71 = por %p69, %p70
      %p72 = scmp.ne.s32.totalorder %s63, %s64
      %p73 = scmp.eq.s32.totalorder %s18, 0
      %p74 = por %p72, %p73
      %p75 = scmp.ne.s32.totalorder %s63, %s64
      %p76 = scmp.eq.s32.totalorder %s19, 1
      %p77 = por %p75, %p76
      %p79 = scmp.ne.s32.totalorder %s64, %s78
      %p80 = scmp.eq.s32.totalorder %s19, 0
      %p81 = por %p79, %p80
      %s83 = sadd.s32 %s82, 1
      %p86 = scmp.eq.s32.totalorder %s13, 1
      %p87 = scmp.ne.s32.totalorder %s82, %s84
      %p88 = scmp.eq.s32.totalorder %s13, 0
      %p89 = por %p87, %p88
      %p90 = scmp.ne.s32.totalorder %s82, %s84
      %p91 = scmp.eq.s32.totalorder %s18, 1
      %p92 = por %p90, %p91
      %p93 = scmp.ne.s32.totalorder %s84, %s85
      %p94 = scmp.eq.s32.totalorder %s18, 0
      %p95 = por %p93, %p94
      %p96 = scmp.ne.s32.totalorder %s84, %s85
      %p97 = scmp.eq.s32.totalorder %s19, 1
      %p98 = por %p96, %p97
      %p100 = scmp.ne.s32.totalorder %s85, %s99
      %p101 = scmp.eq.s32.totalorder %s19, 0
      %p102 = por %p100, %p101
      %s103 = ssub.s32 %s20, %s32
      %p104 = scmp.eq.s32.totalorder %s103, 0
      %s106 = sadd.s32 %s105, 1
      %s107 = scalar_select %p104, %s105, %s106
      %p110 = pneg %p104
      %p111 = scmp.eq.s32.totalorder %s13, 1
      %p112 = por %p110, %p111
      %p113 = scmp.ne.s32.totalorder %s105, %s108
      %p114 = scmp.eq.s32.totalorder %s13, 0
      %p115 = por %p113, %p114
      %p116 = scmp.ne.s32.totalorder %s105, %s108
      %p117 = scmp.eq.s32.totalorder %s18, 1
      %p118 = por %p116, %p117
      %p119 = scmp.ne.s32.totalorder %s108, %s109
      %p120 = scmp.eq.s32.totalorder %s18, 0
      %p121 = por %p119, %p120
      %p122 = scmp.ne.s32.totalorder %s108, %s109
      %p123 = scmp.eq.s32.totalorder %s19, 1
      %p124 = por %p122, %p123
      %p126 = scmp.ne.s32.totalorder %s109, %s125
      %p127 = scmp.eq.s32.totalorder %s19, 0
      %p128 = por %p126, %p127
      %s129 = ssub.s32 %s21, %s28
      %s130 = ssub.s32 %s20, %s32
      %s131 = sor.u32 %s129, %s130
      %p132 = scmp.eq.s32.totalorder %s131, 0
      %s134 = sadd.s32 %s133, 1
      %s135 = scalar_select %p132, %s133, %s134
      %p138 = pneg %p132
      %p139 = scmp.eq.s32.totalorder %s13, 1
      %p140 = por %p138, %p139
      %p141 = scmp.ne.s32.totalorder %s133, %s136
      %p142 = scmp.eq.s32.totalorder %s13, 0
      %p143 = por %p141, %p142
      %p144 = scmp.ne.s32.totalorder %s133, %s136
      %p145 = scmp.eq.s32.totalorder %s18, 1
      %p146 = por %p144, %p145
      %p147 = scmp.ne.s32.totalorder %s136, %s137
      %p148 = scmp.eq.s32.totalorder %s18, 0
      %p149 = por %p147, %p148
      %p150 = scmp.ne.s32.totalorder %s136, %s137
      %p151 = scmp.eq.s32.totalorder %s19, 1
      %p152 = por %p150, %p151
      %p154 = scmp.ne.s32.totalorder %s137, %s153
      %p155 = scmp.eq.s32.totalorder %s19, 0
      %p156 = por %p154, %p155
      %p157 = scmp.le.s32.totalorder 1, %s13
      %p158 = scmp.lt.s32.totalorder %s13, 3
      %p159 = pnand %p157, %p158
      %p160 = pneg %p159
      // Predicated region
      $region9: #{tpu_custom_call.1} parent=5 // pred_check
        _
      $region10: #{tpu_custom_call.1} parent=5 // pred_check_branch
        %162 = sbr.rel (%p159) target = $region12
      $region11: #{tpu_custom_call.1} parent=5 // pred_region
        %s163 = ssub.s32 %s13, 1
        // Predicated region
        $region13: #{tpu_custom_call.1} parent=11 // pred_check
          %p164 = pneg %p74
        $region14: #{tpu_custom_call.1} parent=11 // pred_check_branch
          %166 = sbr.rel (%p164) target = $region16
        $region15: #{tpu_custom_call.1} parent=11 // pred_region
          _
        $region16: #{tpu_custom_call.1} parent=11 // pred_fallthru
          _
        // Predicated region
        $region17: #{tpu_custom_call.1} parent=11 // pred_check
          %p167 = pneg %p95
        $region18: #{tpu_custom_call.1} parent=11 // pred_check_branch
          %169 = sbr.rel (%p167) target = $region20
        $region19: #{tpu_custom_call.1} parent=11 // pred_region
          _
        $region20: #{tpu_custom_call.1} parent=11 // pred_fallthru
          _
        // Predicated region
        $region21: #{tpu_custom_call.1} parent=11 // pred_check
          %p170 = pneg %p121
        $region22: #{tpu_custom_call.1} parent=11 // pred_check_branch
          %172 = sbr.rel (%p170) target = $region24
        $region23: #{tpu_custom_call.1} parent=11 // pred_region
          %s173 = smul.u32 2, %s22
          %p174 = scmp.lt.s32.totalorder %s173, 1
          %s175 = scalar_select %p174, %s173, 1
          %s176 = smul.addr %s175, 4
          %s177 = scalar_lea.vmem %s3, %s176
          %s178 = smul.u32 2, %s22
        $region24: #{tpu_custom_call.1} parent=11 // pred_fallthru
          _
      $region12: #{tpu_custom_call.1} parent=5 // pred_fallthru
        _
      %p179 = scmp.lt.s32.totalorder %s13, 2
      // Predicated region
      $region25: #{tpu_custom_call.1} parent=5 // pred_check
        %p180 = pneg %p179
      $region26: #{tpu_custom_call.1} parent=5 // pred_check_branch
        %182 = sbr.rel (%p180) target = $region28
      $region27: #{tpu_custom_call.1} parent=5 // pred_region
        // Predicated region
        $region29: #{tpu_custom_call.1} parent=27 // pred_check
          %p183 = pneg %p47
        $region30: #{tpu_custom_call.1} parent=27 // pred_check_branch
          %185 = sbr.rel (%p183) target = $region32
        $region31: #{tpu_custom_call.1} parent=27 // pred_region
          %s186 = smul.u32 2, %s20
          %p187 = scmp.lt.s32.totalorder %s21, 1
          %s188 = scalar_select %p187, %s21, 1
          %p189 = scmp.lt.s32.totalorder %s186, 1
          %s190 = scalar_select %p189, %s186, 1
          %s191 = smul.addr %s188, 2
          %s192 = sadd.s32 %s190, %s191
          %s193 = smul.addr %s192, 4
          %s194 = scalar_lea.vmem %s0, %s193
          %s195 = smul.u32 2, %s20
        $region32: #{tpu_custom_call.1} parent=27 // pred_fallthru
          _
      $region28: #{tpu_custom_call.1} parent=5 // pred_fallthru
        _
      %p196 = scmp.le.s32.totalorder 1, %s13
      %p197 = scmp.lt.s32.totalorder %s13, 3
      %p198 = pnand %p196, %p197
      %p199 = pneg %p198
      // Predicated region
      $region33: #{tpu_custom_call.1} parent=5 // pred_check
        _
      $region34: #{tpu_custom_call.1} parent=5 // pred_check_branch
        %201 = sbr.rel (%p198) target = $region36
      $region35: #{tpu_custom_call.1} parent=5 // pred_region
        %s202 = ssub.s32 %s13, 1
        %s203 = smul.u32 2, %s22
        %p204 = scmp.lt.s32.totalorder %s23, 1
        %s205 = scalar_select %p204, %s23, 1
        %p206 = scmp.lt.s32.totalorder %s203, 1
        %s207 = scalar_select %p206, %s203, 1
        %s208 = smul.addr %s205, 2
        %s209 = sadd.s32 %s207, %s208
        %s210 = smul.addr %s209, 4
        %s211 = scalar_lea.vmem %s0, %s210
        %p212 = pneg %p53
        %p213 = pneg %p50
        %p214 = pneg %p74
        %p215 = pneg %p71
        %p216 = pneg %p95
        %p217 = pneg %p92
        %s218 = smul.u32 2, %s22
        %p219 = scmp.lt.s32.totalorder %s218, 1
        %s220 = scalar_select %p219, %s218, 1
        %s221 = smul.addr %s220, 4
        %s222 = scalar_lea.vmem %s3, %s221
        %p223 = pneg %p121
        %p224 = pneg %p118
        %p225 = pneg %p149
        %p226 = pneg %p146
        %s227 = sand.u32 %s136, 1
        %s228 = scalar_lea.sflag [#allocation3], %s227
        %s229 = sand.u32 %s136, 1
        %s230 = smul.addr %s229, 16
        %s231 = scalar_lea.vmem [#allocation2], %s230
        %s232 = smul.u32 2, %s22
        %p233 = scmp.lt.s32.totalorder %s23, 1
        %s234 = scalar_select %p233, %s23, 1
        %p235 = scmp.lt.s32.totalorder %s232, 1
        %s236 = scalar_select %p235, %s232, 1
        %s237 = smul.addr %s234, 2
        %s238 = sadd.s32 %s236, %s237
        %s239 = smul.addr %s238, 4
        %s240 = scalar_lea.vmem %s0, %s239
        %s241 = smul.u32 2, %s22
        %s242 = smul.u32 2, %s22
        %p243 = scmp.lt.s32.totalorder %s242, 1
        %s244 = scalar_select %p243, %s242, 1
        %s245 = smul.addr %s244, 4
        %s246 = scalar_lea.vmem %s3, %s245
        %s247 = smul.u32 2, %s22
        %s248 = smul.u32 2, %s22
        %v249 = vld [vmem:[%s240] sm:$0xf]
        %v250 = vld [vmem:[%s240 + $0x4] sm:$0xf]
        %v251 = vld [vmem:[%s1] sm:$0xf]
        %v252 = vld [vmem:[%s1 + $0x4] sm:$0xf]
        %v253 = vld [vmem:[%s1 + $0x8] sm:$0xf]
        %v254 = vld [vmem:[%s1 + $0xc] sm:$0xf]
        %v255 = vld [vmem:[%s1 + $0x10] sm:$0xf]
        %v256 = vld [vmem:[%s1 + $0x14] sm:$0xf]
        %v257 = vld [vmem:[%s1 + $0x18] sm:$0xf]
        %v258 = vld [vmem:[%s1 + $0x1c] sm:$0xf]
        %v259 = vld [vmem:[%s1 + $0x20] sm:$0xf]
        %v260 = vld [vmem:[%s1 + $0x24] sm:$0xf]
        %v261 = vld [vmem:[%s1 + $0x28] sm:$0xf]
        %v262 = vld [vmem:[%s1 + $0x2c] sm:$0xf]
        %v263 = vld [vmem:[%s1 + $0x30] sm:$0xf]
        %v264 = vld [vmem:[%s1 + $0x34] sm:$0xf]
        %v265 = vld [vmem:[%s1 + $0x38] sm:$0xf]
        %v266 = vld [vmem:[%s1 + $0x3c] sm:$0xf]
        %v267 = vld [vmem:[%s2] sm:$0x1]
        %v268 = vperm.slane %v267, 0
        %v271 = vunpack.c.l.b16 %v249
        %v272 = vunpack.c.l.b16 %v250
        %v273 = vpack.c.b16 %v272, %v271
        %v291 = vunpack.c.l.b16 %v251
        %v292 = vunpack.c.l.b16 %v252
        %v293 = vunpack.c.l.b16 %v253
        %v294 = vunpack.c.l.b16 %v254
        %v295 = vunpack.c.l.b16 %v255
        %v296 = vunpack.c.l.b16 %v256
        %v297 = vunpack.c.l.b16 %v257
        %v298 = vunpack.c.l.b16 %v258
        %v299 = vunpack.c.l.b16 %v259
        %v300 = vunpack.c.l.b16 %v260
        %v301 = vunpack.c.l.b16 %v261
        %v302 = vunpack.c.l.b16 %v262
        %v303 = vunpack.c.l.b16 %v263
        %v304 = vunpack.c.l.b16 %v264
        %v305 = vunpack.c.l.b16 %v265
        %v306 = vunpack.c.l.b16 %v266
        %v307 = vpack.c.b16 %v292, %v291
        %v308 = vpack.c.b16 %v294, %v293
        %v309 = vpack.c.b16 %v296, %v295
        %v310 = vpack.c.b16 %v298, %v297
        %v311 = vpack.c.b16 %v300, %v299
        %v312 = vpack.c.b16 %v302, %v301
        %v313 = vpack.c.b16 %v304, %v303
        %v314 = vpack.c.b16 %v306, %v305
        %323 = vmatpush.bf16.msra.mxu0 %v314
        %324 = vmatpush.bf16.msra.mxu0 %v313
        %325 = vmatpush.bf16.msra.mxu0 %v312
        %326 = vmatpush.bf16.msra.mxu0 %v311
        %327 = vmatpush.bf16.msra.mxu0 %v310
        %328 = vmatpush.bf16.msra.mxu0 %v309
        %329 = vmatpush.bf16.msra.mxu0 %v308
        %330 = vmatpush.bf16.msra.mxu0 %v307
        %331 = vmatmul.bf16.gmra.mxu0 %v273
        %v332 = vpop.f32.mrf.mxu0
        %v333 = vadd.f32 %v268, %v332
        %v334 = vpop.f32.mrf.mxu0
        %v335 = vadd.f32 %v268, %v334
        %336 = vdwg.mxu0
        %vm337 = vcmask 261120
        %v338 = vsel %vm337, %v333, 0.0
        %339 = vadd.xlane.f32.xlu0 %v338
        %v340 = vpop.xlane.xlu0 %339
        %v341 = vsel %vm337, %v335, 0.0
        %342 = vadd.xlane.f32.xlu0 %v341
        %v343 = vpop.xlane.xlu0 %342
        %v344 = vrcp.pop 32.0
        %v345 = vmul.f32 32.0, %v344
        %v346 = vsub.f32 1.0, %v345
        %v347 = vmul.f32 %v344, %v346
        %v348 = vadd.f32 %v344, %v347
        %vm349 = vweird.f32 %v344
        %v350 = vsel %vm349, %v344, %v348
        %v351 = vmul.f32 %v340, %v350
        %v352 = vmul.f32 %v343, %v350
        %v353 = vsub.f32 %v333, %v351
        %v354 = vsub.f32 %v335, %v352
        %v355 = vmul.f32 %v353, %v353
        %v356 = vmul.f32 %v354, %v354
        %v357 = vsel %vm337, %v355, 0.0
        %358 = vadd.xlane.f32.xlu0 %v357
        %v359 = vpop.xlane.xlu0 %358
        %v360 = vsel %vm337, %v356, 0.0
        %361 = vadd.xlane.f32.xlu0 %v360
        %v362 = vpop.xlane.xlu0 %361
        %v363 = vmul.f32 %v359, %v350
        %v364 = vmul.f32 %v362, %v350
        %v365 = vadd.f32 %v363, 1e-05
        %v366 = vadd.f32 %v364, 1e-05
        %v367 = vrsqrt.pop %v365
        %v368 = vmul.f32 %v367, %v365
        %v369 = vmul.f32 %v368, %v367
        %v370 = vmul.f32 0.5, %v369
        %v371 = vsub.f32 1.5, %v370
        %v372 = vmul.f32 %v367, %v371
        %vm373 = vweird.f32 %v365
        %vm374 = vweird.f32 %v367
        %vm375 = vmor %vm373, %vm374
        %v376 = vsel %vm375, %v367, %v372
        %v377 = vrsqrt.pop %v366
        %v378 = vmul.f32 %v377, %v366
        %v379 = vmul.f32 %v378, %v377
        %v380 = vmul.f32 0.5, %v379
        %v381 = vsub.f32 1.5, %v380
        %v382 = vmul.f32 %v377, %v381
        %vm383 = vweird.f32 %v366
        %vm384 = vweird.f32 %v377
        %vm385 = vmor %vm383, %vm384
        %v386 = vsel %vm385, %v377, %v382
        %v387 = vmul.f32 %v353, %v376
        %v388 = vmul.f32 %v354, %v386
        %v389 = vld [vmem:[%s2 + $0x1] sm:$0x1]
        %v390 = vperm.slane %v389, 0
        %v391 = vmul.f32 %v387, %v390
        %v392 = vmul.f32 %v388, %v390
        %v393 = vld [vmem:[%s246] sm:$0xf]
        %v394 = vld [vmem:[%s246 + $0x4] sm:$0xf]
        %v395 = vunpack.c.l.bf16 %v393
        %v396 = vunpack.c.l.bf16 %v394
        %v397 = vadd.f32 %v391, %v395
        %v398 = vadd.f32 %v392, %v396
        %399 = vst.msk [vmem:[%s231] sm:$0xff] %vm337, %v397
        %400 = vst.msk [vmem:[%s231 + $0x8] sm:$0xff] %vm337, %v398
        %s401 = sand.u32 %s136, 1
        %s402 = scalar_lea.sflag [#allocation3], %s401
        %s403 = sand.u32 %s136, 1
        %s404 = smul.addr %s403, 16
        %s405 = scalar_lea.vmem [#allocation2], %s404
        // Predicated region
        $region37: #{tpu_custom_call.1} parent=35 // pred_check
          %p406 = pneg %p146
        $region38: #{tpu_custom_call.1} parent=35 // pred_check_branch
          %408 = sbr.rel (%p406) target = $region40
        $region39: #{tpu_custom_call.1} parent=35 // pred_region
          %s409 = smul.u32 2, %s22
          %411 = vsyncadd %s402, 0
          %s412 = smul.addr %s23, 2
          %s413 = sadd.s32 %s409, %s412
          %s414 = smul.addr %s413, 8
          %s415 = scalar_lea.hbm %s4, %s414
          %s416 = sshll.u32 %s405, 4
          %s417 = int_to_ptr.vmem [resolvable:$true] %s416
          %s418 = sshll.u32 %s415, 4
          %s419 = int_to_ptr.hbm [resolvable:$true] %s418
          %424 = dma.vmem_to_hbm [thread:$0]  %s417, 256, %s419, %s402, 128, 128, 8
        $region40: #{tpu_custom_call.1} parent=35 // pred_fallthru
          _
      $region36: #{tpu_custom_call.1} parent=5 // pred_fallthru
        _
      %p425 = scmp.le.s32.totalorder 2, %s13
      // Predicated region
      $region41: #{tpu_custom_call.1} parent=5 // pred_check
        %p426 = pneg %p425
      $region42: #{tpu_custom_call.1} parent=5 // pred_check_branch
        %428 = sbr.rel (%p426) target = $region44
      $region43: #{tpu_custom_call.1} parent=5 // pred_region
        %s429 = ssub.s32 %s13, 2
        // Predicated region
        $region45: #{tpu_custom_call.1} parent=43 // pred_check
          %p430 = pneg %p152
        $region46: #{tpu_custom_call.1} parent=43 // pred_check_branch
          %432 = sbr.rel (%p430) target = $region48
        $region47: #{tpu_custom_call.1} parent=43 // pred_region
          %s433 = sand.u32 %s137, 1
          %s434 = scalar_lea.sflag [#allocation3], %s433
          %s435 = sand.u32 %s137, 1
          %s436 = smul.addr %s435, 16
          %s437 = scalar_lea.vmem [#allocation2], %s436
          %439 = dma.done %s434, 256
        $region48: #{tpu_custom_call.1} parent=43 // pred_fallthru
          _
      $region44: #{tpu_custom_call.1} parent=5 // pred_fallthru
        _
    $region6: #{tpu_custom_call.1} parent=1 // loop_footer
      %s17 = sadd.s32 1, %s13
    $region7: #{tpu_custom_call.1} parent=1 // loop_footer_branch
      %12 = sbr.rel target = $region3
    $region8: #{tpu_custom_call.1} parent=1 // loop_exit
      _
    %440 = vsyncpa [#allocation3], 1
    %s441 = scalar_lea.sflag [#allocation3], 1
    %442 = vsyncpa %s441, 1

// kernel: tpu_custom_call.1
$region0: #{tpu_custom_call.1}
  #allocation0 [shape = 'u32[]', space=smem, size = 0x4, offset = 0x4, fixed_abs, tag = 'smem constant byte address 0x4 - core index']
  #allocation1 [shape = 'u32[72,128]{1,0:T(1,128)}', space=vmem, size = 0x9000, scoped, tag = 'internal scratch']
  %s0 = inlined_call_operand.vmem [shape: bf16[2,16,128], index: 0, kind: input, shape index: {}]
  %s1 = inlined_call_operand.vmem [shape: bf16[128,32], index: 1, kind: input, shape index: {}]
  %s2 = inlined_call_operand.vmem [shape: f32[2,32], index: 2, kind: input, shape index: {}]
  %s3 = inlined_call_operand.vmem [shape: bf16[16,32], index: 3, kind: input, shape index: {}]
  %s4 = inlined_call_operand.hbm [shape: f32[2,16,32], index: 4, kind: output, shape index: {}]
  %s5 = sld [smem:[#allocation0]]
  $region49: #{tpu_custom_call.1} parent=0
    _
  %s7 = ssub.s32 1, %s5
  %s8 = scalar_select 0, %s7, %s5
  $region1: #{tpu_custom_call.1} parent=0
    #allocation2 [shape = 'u8[16384]{0}', space=vmem, size = 0x4000, scoped, tag = 'output window, operand 0']
    #allocation3 [shape = 's32[2]{0}', space=sflag, size = 0x8, scoped, tag = 'scoped memory for tpu_custom_call.1']
    %9 = vsyncpa [#allocation3], 0
    %s10 = scalar_lea.sflag [#allocation3], 1
    %11 = vsyncpa %s10, 0
    loop: start=0, step=1, limit=4
    $region2: #{tpu_custom_call.1} parent=1 // loop_pre_header
      _
    $region3: #{tpu_custom_call.1} parent=1 // loop_header
      %s13 = sphi 0, %s17
      %p14 = scmp.ge.s32.totalorder %s13, 4
      %s20 = sphi 0, %s32
      %s21 = sphi 0, %s28
      %s22 = sphi 0, %s20
      %s23 = sphi 0, %s21
      %s24 = sphi 0, %s22
      %s25 = sphi 0, %s23
      %s37 = sphi 0, %s39
      %s40 = sphi 0, %s37
      %s41 = sphi 0, %s40
      %s57 = sphi 0, %s41
      %s61 = sphi 0, %s61
      %s63 = sphi 0, %s61
      %s64 = sphi 0, %s63
      %s78 = sphi 0, %s64
      %s82 = sphi 0, %s82
      %s84 = sphi 0, %s82
      %s85 = sphi 0, %s84
      %s99 = sphi 0, %s85
      %s105 = sphi 0, %s107
      %s108 = sphi 0, %s105
      %s109 = sphi 0, %s108
      %s125 = sphi 0, %s109
      %s133 = sphi 0, %s135
      %s136 = sphi 0, %s133
      %s137 = sphi 0, %s136
      %s153 = sphi 0, %s137
    $region4: #{tpu_custom_call.1} parent=1 // loop_header_branch
      %16 = sbr.rel (%p14) target = $region8
    $region5: #{tpu_custom_call.1} parent=1 // loop_body
      %s18 = ssub.s32 %s13, 1
      %s19 = ssub.s32 %s13, 2
      %s26 = sadd.s32 1, %s21
      %p27 = scmp.ge.s32.totalorder %s26, 2
      %s28 = scalar_select %p27, 0, %s26
      %s29 = sadd.s32 1, %s20
      %s30 = scalar_select %p27, %s29, %s20
      %p31 = scmp.ge.s32.totalorder %s30, 1
      %s32 = scalar_select %p31, 0, %s30
      %s33 = ssub.s32 %s21, %s28
      %s34 = ssub.s32 %s20, %s32
      %s35 = sor.u32 %s33, %s34
      %p36 = scmp.eq.s32.totalorder %s35, 0
      %s38 = sadd.s32 %s37, 1
      %s39 = scalar_select %p36, %s37, %s38
      %p42 = pneg %p36
      %p43 = scmp.eq.s32.totalorder %s13, 1
      %p44 = por %p42, %p43
      %p45 = scmp.ne.s32.totalorder %s37, %s40
      %p46 = scmp.eq.s32.totalorder %s13, 0
      %p47 = por %p45, %p46
      %p48 = scmp.ne.s32.totalorder %s37, %s40
      %p49 = scmp.eq.s32.totalorder %s18, 1
      %p50 = por %p48, %p49
      %p51 = scmp.ne.s32.totalorder %s40, %s41
      %p52 = scmp.eq.s32.totalorder %s18, 0
      %p53 = por %p51, %p52
      %p54 = scmp.ne.s32.totalorder %s40, %s41
      %p55 = scmp.eq.s32.totalorder %s19, 1
      %p56 = por %p54, %p55
      %p58 = scmp.ne.s32.totalorder %s41, %s57
      %p59 = scmp.eq.s32.totalorder %s19, 0
      %p60 = por %p58, %p59
      %s62 = sadd.s32 %s61, 1
      %p65 = scmp.eq.s32.totalorder %s13, 1
      %p66 = scmp.ne.s32.totalorder %s61, %s63
      %p67 = scmp.eq.s32.totalorder %s13, 0
      %p68 = por %p66, %p67
      %p69 = scmp.ne.s32.totalorder %s61, %s63
      %p70 = scmp.eq.s32.totalorder %s18, 1
      %p71 = por %p69, %p70
      %p72 = scmp.ne.s32.totalorder %s63, %s64
      %p73 = scmp.eq.s32.totalorder %s18, 0
      %p74 = por %p72, %p73
      %p75 = scmp.ne.s32.totalorder %s63, %s64
      %p76 = scmp.eq.s32.totalorder %s19, 1
      %p77 = por %p75, %p76
      %p79 = scmp.ne.s32.totalorder %s64, %s78
      %p80 = scmp.eq.s32.totalorder %s19, 0
      %p81 = por %p79, %p80
      %s83 = sadd.s32 %s82, 1
      %p86 = scmp.eq.s32.totalorder %s13, 1
      %p87 = scmp.ne.s32.totalorder %s82, %s84
      %p88 = scmp.eq.s32.totalorder %s13, 0
      %p89 = por %p87, %p88
      %p90 = scmp.ne.s32.totalorder %s82, %s84
      %p91 = scmp.eq.s32.totalorder %s18, 1
      %p92 = por %p90, %p91
      %p93 = scmp.ne.s32.totalorder %s84, %s85
      %p94 = scmp.eq.s32.totalorder %s18, 0
      %p95 = por %p93, %p94
      %p96 = scmp.ne.s32.totalorder %s84, %s85
      %p97 = scmp.eq.s32.totalorder %s19, 1
      %p98 = por %p96, %p97
      %p100 = scmp.ne.s32.totalorder %s85, %s99
      %p101 = scmp.eq.s32.totalorder %s19, 0
      %p102 = por %p100, %p101
      %s103 = ssub.s32 %s20, %s32
      %p104 = scmp.eq.s32.totalorder %s103, 0
      %s106 = sadd.s32 %s105, 1
      %s107 = scalar_select %p104, %s105, %s106
      %p110 = pneg %p104
      %p111 = scmp.eq.s32.totalorder %s13, 1
      %p112 = por %p110, %p111
      %p113 = scmp.ne.s32.totalorder %s105, %s108
      %p114 = scmp.eq.s32.totalorder %s13, 0
      %p115 = por %p113, %p114
      %p116 = scmp.ne.s32.totalorder %s105, %s108
      %p117 = scmp.eq.s32.totalorder %s18, 1
      %p118 = por %p116, %p117
      %p119 = scmp.ne.s32.totalorder %s108, %s109
      %p120 = scmp.eq.s32.totalorder %s18, 0
      %p121 = por %p119, %p120
      %p122 = scmp.ne.s32.totalorder %s108, %s109
      %p123 = scmp.eq.s32.totalorder %s19, 1
      %p124 = por %p122, %p123
      %p126 = scmp.ne.s32.totalorder %s109, %s125
      %p127 = scmp.eq.s32.totalorder %s19, 0
      %p128 = por %p126, %p127
      %s129 = ssub.s32 %s21, %s28
      %s130 = ssub.s32 %s20, %s32
      %s131 = sor.u32 %s129, %s130
      %p132 = scmp.eq.s32.totalorder %s131, 0
      %s134 = sadd.s32 %s133, 1
      %s135 = scalar_select %p132, %s133, %s134
      %p138 = pneg %p132
      %p139 = scmp.eq.s32.totalorder %s13, 1
      %p140 = por %p138, %p139
      %p141 = scmp.ne.s32.totalorder %s133, %s136
      %p142 = scmp.eq.s32.totalorder %s13, 0
      %p143 = por %p141, %p142
      %p144 = scmp.ne.s32.totalorder %s133, %s136
      %p145 = scmp.eq.s32.totalorder %s18, 1
      %p146 = por %p144, %p145
      %p147 = scmp.ne.s32.totalorder %s136, %s137
      %p148 = scmp.eq.s32.totalorder %s18, 0
      %p149 = por %p147, %p148
      %p150 = scmp.ne.s32.totalorder %s136, %s137
      %p151 = scmp.eq.s32.totalorder %s19, 1
      %p152 = por %p150, %p151
      %p154 = scmp.ne.s32.totalorder %s137, %s153
      %p155 = scmp.eq.s32.totalorder %s19, 0
      %p156 = por %p154, %p155
      %p157 = scmp.le.s32.totalorder 1, %s13
      %p158 = scmp.lt.s32.totalorder %s13, 3
      %p159 = pnand %p157, %p158
      %p160 = pneg %p159
      // Predicated region
      $region9: #{tpu_custom_call.1} parent=5 // pred_check
        _
      $region10: #{tpu_custom_call.1} parent=5 // pred_check_branch
        %162 = sbr.rel (%p159) target = $region12
      $region11: #{tpu_custom_call.1} parent=5 // pred_region
        %s163 = ssub.s32 %s13, 1
        // Predicated region
        $region13: #{tpu_custom_call.1} parent=11 // pred_check
          %p164 = pneg %p74
        $region14: #{tpu_custom_call.1} parent=11 // pred_check_branch
          %166 = sbr.rel (%p164) target = $region16
        $region15: #{tpu_custom_call.1} parent=11 // pred_region
          _
        $region16: #{tpu_custom_call.1} parent=11 // pred_fallthru
          _
        // Predicated region
        $region17: #{tpu_custom_call.1} parent=11 // pred_check
          %p167 = pneg %p95
        $region18: #{tpu_custom_call.1} parent=11 // pred_check_branch
          %169 = sbr.rel (%p167) target = $region20
        $region19: #{tpu_custom_call.1} parent=11 // pred_region
          _
        $region20: #{tpu_custom_call.1} parent=11 // pred_fallthru
          _
        // Predicated region
        $region21: #{tpu_custom_call.1} parent=11 // pred_check
          %p170 = pneg %p121
        $region22: #{tpu_custom_call.1} parent=11 // pred_check_branch
          %172 = sbr.rel (%p170) target = $region24
        $region23: #{tpu_custom_call.1} parent=11 // pred_region
          %s173 = smul.u32 2, %s22
          %p174 = scmp.lt.s32.totalorder %s173, 1
          %s175 = scalar_select %p174, %s173, 1
          %s176 = smul.addr %s175, 4
          %s177 = scalar_lea.vmem %s3, %s176
          %s178 = smul.u32 2, %s22
        $region24: #{tpu_custom_call.1} parent=11 // pred_fallthru
          _
      $region12: #{tpu_custom_call.1} parent=5 // pred_fallthru
        _
      %p179 = scmp.lt.s32.totalorder %s13, 2
      // Predicated region
      $region25: #{tpu_custom_call.1} parent=5 // pred_check
        %p180 = pneg %p179
      $region26: #{tpu_custom_call.1} parent=5 // pred_check_branch
        %182 = sbr.rel (%p180) target = $region28
      $region27: #{tpu_custom_call.1} parent=5 // pred_region
        // Predicated region
        $region29: #{tpu_custom_call.1} parent=27 // pred_check
          %p183 = pneg %p47
        $region30: #{tpu_custom_call.1} parent=27 // pred_check_branch
          %185 = sbr.rel (%p183) target = $region32
        $region31: #{tpu_custom_call.1} parent=27 // pred_region
          %s186 = smul.u32 2, %s20
          %p187 = scmp.lt.s32.totalorder %s21, 1
          %s188 = scalar_select %p187, %s21, 1
          %p189 = scmp.lt.s32.totalorder %s186, 1
          %s190 = scalar_select %p189, %s186, 1
          %s191 = smul.addr %s188, 2
          %s192 = sadd.s32 %s190, %s191
          %s193 = smul.addr %s192, 4
          %s194 = scalar_lea.vmem %s0, %s193
          %s195 = smul.u32 2, %s20
        $region32: #{tpu_custom_call.1} parent=27 // pred_fallthru
          _
      $region28: #{tpu_custom_call.1} parent=5 // pred_fallthru
        _
      %p196 = scmp.le.s32.totalorder 1, %s13
      %p197 = scmp.lt.s32.totalorder %s13, 3
      %p198 = pnand %p196, %p197
      %p199 = pneg %p198
      // Predicated region
      $region33: #{tpu_custom_call.1} parent=5 // pred_check
        _
      $region34: #{tpu_custom_call.1} parent=5 // pred_check_branch
        %201 = sbr.rel (%p198) target = $region36
      $region35: #{tpu_custom_call.1} parent=5 // pred_region
        %s202 = ssub.s32 %s13, 1
        %s203 = smul.u32 2, %s22
        %p204 = scmp.lt.s32.totalorder %s23, 1
        %s205 = scalar_select %p204, %s23, 1
        %p206 = scmp.lt.s32.totalorder %s203, 1
        %s207 = scalar_select %p206, %s203, 1
        %s208 = smul.addr %s205, 2
        %s209 = sadd.s32 %s207, %s208
        %s210 = smul.addr %s209, 4
        %s211 = scalar_lea.vmem %s0, %s210
        %p212 = pneg %p53
        %p213 = pneg %p50
        %p214 = pneg %p74
        %p215 = pneg %p71
        %p216 = pneg %p95
        %p217 = pneg %p92
        %s218 = smul.u32 2, %s22
        %p219 = scmp.lt.s32.totalorder %s218, 1
        %s220 = scalar_select %p219, %s218, 1
        %s221 = smul.addr %s220, 4
        %s222 = scalar_lea.vmem %s3, %s221
        %p223 = pneg %p121
        %p224 = pneg %p118
        %p225 = pneg %p149
        %p226 = pneg %p146
        %s227 = sand.u32 %s136, 1
        %s228 = scalar_lea.sflag [#allocation3], %s227
        %s229 = sand.u32 %s136, 1
        %s230 = smul.addr %s229, 16
        %s231 = scalar_lea.vmem [#allocation2], %s230
        %s232 = smul.u32 2, %s22
        %p233 = scmp.lt.s32.totalorder %s23, 1
        %s234 = scalar_select %p233, %s23, 1
        %p235 = scmp.lt.s32.totalorder %s232, 1
        %s236 = scalar_select %p235, %s232, 1
        %s237 = smul.addr %s234, 2
        %s238 = sadd.s32 %s236, %s237
        %s239 = smul.addr %s238, 4
        %s240 = scalar_lea.vmem %s0, %s239
        %s241 = smul.u32 2, %s22
        %s242 = smul.u32 2, %s22
        %p243 = scmp.lt.s32.totalorder %s242, 1
        %s244 = scalar_select %p243, %s242, 1
        %s245 = smul.addr %s244, 4
        %s246 = scalar_lea.vmem %s3, %s245
        %s247 = smul.u32 2, %s22
        %s248 = smul.u32 2, %s22
        %v249 = vld [vmem:[%s240] sm:$0xf]
        %v250 = vld [vmem:[%s240 + $0x4] sm:$0xf]
        %v251 = vld [vmem:[%s1] sm:$0xf]
        %v252 = vld [vmem:[%s1 + $0x4] sm:$0xf]
        %v253 = vld [vmem:[%s1 + $0x8] sm:$0xf]
        %v254 = vld [vmem:[%s1 + $0xc] sm:$0xf]
        %v255 = vld [vmem:[%s1 + $0x10] sm:$0xf]
        %v256 = vld [vmem:[%s1 + $0x14] sm:$0xf]
        %v257 = vld [vmem:[%s1 + $0x18] sm:$0xf]
        %v258 = vld [vmem:[%s1 + $0x1c] sm:$0xf]
        %v259 = vld [vmem:[%s1 + $0x20] sm:$0xf]
        %v260 = vld [vmem:[%s1 + $0x24] sm:$0xf]
        %v261 = vld [vmem:[%s1 + $0x28] sm:$0xf]
        %v262 = vld [vmem:[%s1 + $0x2c] sm:$0xf]
        %v263 = vld [vmem:[%s1 + $0x30] sm:$0xf]
        %v264 = vld [vmem:[%s1 + $0x34] sm:$0xf]
        %v265 = vld [vmem:[%s1 + $0x38] sm:$0xf]
        %v266 = vld [vmem:[%s1 + $0x3c] sm:$0xf]
        %v267 = vld [vmem:[%s2] sm:$0x1]
        %v268 = vperm.slane %v267, 0
        %v271 = vunpack.c.l.b16 %v249
        %v272 = vunpack.c.l.b16 %v250
        %v273 = vpack.c.b16 %v272, %v271
        %v291 = vunpack.c.l.b16 %v251
        %v292 = vunpack.c.l.b16 %v252
        %v293 = vunpack.c.l.b16 %v253
        %v294 = vunpack.c.l.b16 %v254
        %v295 = vunpack.c.l.b16 %v255
        %v296 = vunpack.c.l.b16 %v256
        %v297 = vunpack.c.l.b16 %v257
        %v298 = vunpack.c.l.b16 %v258
        %v299 = vunpack.c.l.b16 %v259
        %v300 = vunpack.c.l.b16 %v260
        %v301 = vunpack.c.l.b16 %v261
        %v302 = vunpack.c.l.b16 %v262
        %v303 = vunpack.c.l.b16 %v263
        %v304 = vunpack.c.l.b16 %v264
        %v305 = vunpack.c.l.b16 %v265
        %v306 = vunpack.c.l.b16 %v266
        %v307 = vpack.c.b16 %v292, %v291
        %v308 = vpack.c.b16 %v294, %v293
        %v309 = vpack.c.b16 %v296, %v295
        %v310 = vpack.c.b16 %v298, %v297
        %v311 = vpack.c.b16 %v300, %v299
        %v312 = vpack.c.b16 %v302, %v301
        %v313 = vpack.c.b16 %v304, %v303
        %v314 = vpack.c.b16 %v306, %v305
        %323 = vmatpush.bf16.msra.mxu0 %v314
        %324 = vmatpush.bf16.msra.mxu0 %v313
        %325 = vmatpush.bf16.msra.mxu0 %v312
        %326 = vmatpush.bf16.msra.mxu0 %v311
        %327 = vmatpush.bf16.msra.mxu0 %v310
        %328 = vmatpush.bf16.msra.mxu0 %v309
        %329 = vmatpush.bf16.msra.mxu0 %v308
        %330 = vmatpush.bf16.msra.mxu0 %v307
        %331 = vmatmul.bf16.gmra.mxu0 %v273
        %v332 = vpop.f32.mrf.mxu0
        %v333 = vadd.f32 %v268, %v332
        %v334 = vpop.f32.mrf.mxu0
        %v335 = vadd.f32 %v268, %v334
        %336 = vdwg.mxu0
        %vm337 = vcmask 261120
        %v338 = vsel %vm337, %v333, 0.0
        %339 = vadd.xlane.f32.xlu0 %v338
        %v340 = vpop.xlane.xlu0 %339
        %v341 = vsel %vm337, %v335, 0.0
        %342 = vadd.xlane.f32.xlu0 %v341
        %v343 = vpop.xlane.xlu0 %342
        %v344 = vrcp.pop 32.0
        %v345 = vmul.f32 32.0, %v344
        %v346 = vsub.f32 1.0, %v345
        %v347 = vmul.f32 %v344, %v346
        %v348 = vadd.f32 %v344, %v347
        %vm349 = vweird.f32 %v344
        %v350 = vsel %vm349, %v344, %v348
        %v351 = vmul.f32 %v340, %v350
        %v352 = vmul.f32 %v343, %v350
        %v353 = vsub.f32 %v333, %v351
        %v354 = vsub.f32 %v335, %v352
        %v355 = vmul.f32 %v353, %v353
        %v356 = vmul.f32 %v354, %v354
        %v357 = vsel %vm337, %v355, 0.0
        %358 = vadd.xlane.f32.xlu0 %v357
        %v359 = vpop.xlane.xlu0 %358
        %v360 = vsel %vm337, %v356, 0.0
        %361 = vadd.xlane.f32.xlu0 %v360
        %v362 = vpop.xlane.xlu0 %361
        %v363 = vmul.f32 %v359, %v350
        %v364 = vmul.f32 %v362, %v350
        %v365 = vadd.f32 %v363, 1e-05
        %v366 = vadd.f32 %v364, 1e-05
        %v367 = vrsqrt.pop %v365
        %v368 = vmul.f32 %v367, %v365
        %v369 = vmul.f32 %v368, %v367
        %v370 = vmul.f32 0.5, %v369
        %v371 = vsub.f32 1.5, %v370
        %v372 = vmul.f32 %v367, %v371
        %vm373 = vweird.f32 %v365
        %vm374 = vweird.f32 %v367
        %vm375 = vmor %vm373, %vm374
        %v376 = vsel %vm375, %v367, %v372
        %v377 = vrsqrt.pop %v366
        %v378 = vmul.f32 %v377, %v366
        %v379 = vmul.f32 %v378, %v377
        %v380 = vmul.f32 0.5, %v379
        %v381 = vsub.f32 1.5, %v380
        %v382 = vmul.f32 %v377, %v381
        %vm383 = vweird.f32 %v366
        %vm384 = vweird.f32 %v377
        %vm385 = vmor %vm383, %vm384
        %v386 = vsel %vm385, %v377, %v382
        %v387 = vmul.f32 %v353, %v376
        %v388 = vmul.f32 %v354, %v386
        %v389 = vld [vmem:[%s2 + $0x1] sm:$0x1]
        %v390 = vperm.slane %v389, 0
        %v391 = vmul.f32 %v387, %v390
        %v392 = vmul.f32 %v388, %v390
        %v393 = vld [vmem:[%s246] sm:$0xf]
        %v394 = vld [vmem:[%s246 + $0x4] sm:$0xf]
        %v395 = vunpack.c.l.bf16 %v393
        %v396 = vunpack.c.l.bf16 %v394
        %v397 = vadd.f32 %v391, %v395
        %v398 = vadd.f32 %v392, %v396
        %399 = vst.msk [vmem:[%s231] sm:$0xff] %vm337, %v397
        %400 = vst.msk [vmem:[%s231 + $0x8] sm:$0xff] %vm337, %v398
        %s401 = sand.u32 %s136, 1
        %s402 = scalar_lea.sflag [#allocation3], %s401
        %s403 = sand.u32 %s136, 1
        %s404 = smul.addr %s403, 16
        %s405 = scalar_lea.vmem [#allocation2], %s404
        // Predicated region
        $region37: #{tpu_custom_call.1} parent=35 // pred_check
          %p406 = pneg %p146
        $region38: #{tpu_custom_call.1} parent=35 // pred_check_branch
          %408 = sbr.rel (%p406) target = $region40
        $region39: #{tpu_custom_call.1} parent=35 // pred_region
          %s409 = smul.u32 2, %s22
          %411 = vsyncadd %s402, 0
          %s412 = smul.addr %s23, 2
          %s413 = sadd.s32 %s409, %s412
          %s414 = smul.addr %s413, 8
          %s415 = scalar_lea.hbm %s4, %s414
          %s416 = sshll.u32 %s405, 4
          %s417 = int_to_ptr.vmem [resolvable:$true] %s416
          %s418 = sshll.u32 %s415, 4
          %s419 = int_to_ptr.hbm [resolvable:$true] %s418
          %424 = dma.vmem_to_hbm [thread:$0]  %s417, 256, %s419, %s402, 128, 128, 8
        $region40: #{tpu_custom_call.1} parent=35 // pred_fallthru
          _
      $region36: #{tpu_custom_call.1} parent=5 // pred_fallthru
        _
      %p425 = scmp.le.s32.totalorder 2, %s13
      // Predicated region
      $region41: #{tpu_custom_call.1} parent=5 // pred_check
        %p426 = pneg %p425
      $region42: #{tpu_custom_call.1} parent=5 // pred_check_branch
        %428 = sbr.rel (%p426) target = $region44
      $region43: #{tpu_custom_call.1} parent=5 // pred_region
        %s429 = ssub.s32 %s13, 2
        // Predicated region
        $region45: #{tpu_custom_call.1} parent=43 // pred_check
          %p430 = pneg %p152
        $region46: #{tpu_custom_call.1} parent=43 // pred_check_branch
          %432 = sbr.rel (%p430) target = $region48
        $region47: #{tpu_custom_call.1} parent=43 // pred_region
          %s433 = sand.u32 %s137, 1
          %s434 = scalar_lea.sflag [#allocation3], %s433
          %s435 = sand.u32 %s137, 1
          %s436 = smul.addr %s435, 16
          %s437 = scalar_lea.vmem [#allocation2], %s436
          %439 = dma.done %s434, 256
        $region48: #{tpu_custom_call.1} parent=43 // pred_fallthru
          _
      $region44: #{tpu_custom_call.1} parent=5 // pred_fallthru
        _
    $region6: #{tpu_custom_call.1} parent=1 // loop_footer
      %s17 = sadd.s32 1, %s13
    $region7: #{tpu_custom_call.1} parent=1 // loop_footer_branch
      %12 = sbr.rel target = $region3
    $region8: #{tpu_custom_call.1} parent=1 // loop_exit
      _
    %440 = vsyncpa [#allocation3], 1
    %s441 = scalar_lea.sflag [#allocation3], 1
    %442 = vsyncpa %s441, 1

</llo_original>
